<compile_context>
chip_gen: v7x
topology: tpu7x:2x2x1
jax: 0.10.0
libtpu: 0.0.40
codegen_flags: <defaults>
</compile_context>

<pallas_src>
import numpy as np
import jax
import jax.numpy as jnp
from jax.experimental import pallas as pl
from jax.experimental.pallas import tpu as pltpu

_TN_MAX = 2048          # lane-dense column tile for the (rare) huge-row fallback
_TILE_BUDGET_1BUF = 8 << 20   # output tile budget when only the output is O(N^2)
_TILE_BUDGET_2BUF = 6 << 20   # per-tile budget when a full-rank param_a is also streamed


def _add_kernel(row_ref, col_ref, o_ref):
    # row_ref: (tm, 1) f32, col_ref: (1, tn) f32, both already scaled by -a
    # (scalar-a path).  One broadcast add + one unmasked full-width store.
    o_ref[...] = (row_ref[...] + col_ref[...]).astype(o_ref.dtype)


def _scale_add_kernel(a_ref, row_ref, col_ref, o_ref):
    # General param_a path.  row/col already carry the minus sign (f32), so
    #   a * (neg_row + neg_col) == -a * (row + col).
    # a_ref is (tm,1), (1,tn) or (tm,tn) depending on param_a's shape.
    s = row_ref[...] + col_ref[...]
    o_ref[...] = (a_ref[...].astype(jnp.float32) * s).astype(o_ref.dtype)


def _pick_tiles(n0, n1, itemsize, tile_budget_bytes):
    """Pick (tm, tn) honoring the (8,128)/full-dim constraint, preferring
    full-row (contiguous HBM) tiles."""
    row_bytes = n1 * itemsize
    if row_bytes <= tile_budget_bytes:
        # Full-row tiling: each block is one contiguous HBM slab.
        tn = n1
        tm_cap = tile_budget_bytes // row_bytes
        if tm_cap >= n0:
            return n0, tn
        tm = max(8, (tm_cap // 8) * 8)
        # Prefer a multiple of 8 that divides n0 (no ragged last row-block).
        cand, tries = tm, 0
        while cand >= 8 and tries < 256:
            if n0 % cand == 0:
                tm = cand
                break
            cand -= 8
            tries += 1
        return min(tm, n0), tn
    # A single full row exceeds the budget (enormous n1): lane-dense 2-D tiling.
    tn = min((n1 // 128) * 128, _TN_MAX)
    tm_cap = tile_budget_bytes // (tn * itemsize)
    tm = min(n0, max(8, (tm_cap // 8) * 8))
    return tm, tn


def poi2d_with_a_tensor_cat(quad_x, param_a, tensor_dim, quad_concat):
    """Pallas equivalent of Poi2d_with_a_tensor_cat.forward (2-D tensor_dim)."""
    # TODO(synk): only the 2-D tensor_dim / 2-group case is implemented; the
    # torch module's generic N-D roll/permute loop is out of scope here.
    assert len(tensor_dim) == 2 and len(quad_concat) == 2
    n0, n1 = int(tensor_dim[0]), int(tensor_dim[1])

    x_dtype = quad_x[quad_concat[0][0]].dtype
    a = jnp.asarray(param_a)
    if a.ndim > 2:
        assert all(int(d) == 1 for d in a.shape[:-2]), \
            "param_a leading dims must be singleton"
        a = a.reshape(a.shape[-2:])
    out_dtype = jnp.result_type(a.dtype, x_dtype)

    def group_factor(idx, n):
        f = None
        for k in idx:
            x = quad_x[k][:, 0].astype(jnp.float32)
            assert x.shape[0] == n
            t = x * x - x
            f = t if f is None else f + t
        return f

    # O(N) factor precompute in plain XLA (negligible vs. the O(N^2) store),
    # kept in f32 so the final product is rounded only once, at the store.
    row = group_factor(quad_concat[0], n0)      # (n0,) varies along axis 0
    col = group_factor(quad_concat[1], n1)      # (n1,) varies along axis 1

    # Lane width < 128 (or sublane < 8) would force masked partial stores and
    # the whole problem is tiny -> let XLA handle it.
    if n1 < 128 or n0 < 8:
        out = -(a.astype(jnp.float32)) * (row[:, None] + col[None, :])
        return out.astype(out_dtype)

    # ---- classify param_a so we never materialize a full (n0, n1) -a ----
    scalar_a = int(a.size) == 1
    a_shape2 = tuple(a.shape) if a.ndim == 2 else (1,) * (2 - a.ndim) + tuple(a.shape)
    row_like_a = (not scalar_a) and a_shape2 == (n0, 1)
    col_like_a = (not scalar_a) and a_shape2 == (1, n1)
    full_a = not (scalar_a or row_like_a or col_like_a)

    # ---- tile selection (generation-agnostic VMEM budget, set explicitly) ----
    itemsize = max(int(jnp.dtype(out_dtype).itemsize), 4)
    tile_budget = _TILE_BUDGET_2BUF if full_a else _TILE_BUDGET_1BUF
    tm, tn = _pick_tiles(n0, n1, itemsize, tile_budget)

    # v7x has 2 TensorCores: make sure at least one parallel axis has >=2 blocks.
    if pl.cdiv(n0, tm) * pl.cdiv(n1, tn) < 2 and n0 >= 16:
        tm = min(tm, ((pl.cdiv(n0, 2) + 7) // 8) * 8)

    grid = (pl.cdiv(n0, tm), pl.cdiv(n1, tn))

    tile_bytes = tm * tn * itemsize
    n_big = 2 if full_a else 1                       # output (+ full-rank a input)
    vmem_limit = min(max(2 * n_big * tile_bytes + (2 << 20), 16 << 20), 48 << 20)
    cparams = pltpu.CompilerParams(
        dimension_semantics=("parallel", "parallel"),
        vmem_limit_bytes=int(vmem_limit))

    out_bytes = n0 * n1 * int(jnp.dtype(out_dtype).itemsize)
    a_bytes = (n0 * n1 if full_a else int(a.size)) * int(jnp.dtype(a.dtype).itemsize)
    cost = pl.CostEstimate(
        flops=(1 if scalar_a else 2) * n0 * n1,
        transcendentals=0,
        bytes_accessed=int(out_bytes + a_bytes + (n0 + n1) * 4))

    row_spec = pl.BlockSpec((tm, 1), lambda i, j: (i, 0))
    col_spec = pl.BlockSpec((1, tn), lambda i, j: (0, j))
    out_spec = pl.BlockSpec((tm, tn), lambda i, j: (i, j))

    if scalar_a:
        # Fold scalar -a into the O(N) factors: -a*(row+col) == (-a*row)+(-a*col).
        neg_a = -a.reshape(()).astype(jnp.float32)
        row2 = (neg_a * row).reshape(n0, 1)
        col2 = (neg_a * col).reshape(1, n1)
        return pl.pallas_call(
            _add_kernel,
            out_shape=jax.ShapeDtypeStruct((n0, n1), out_dtype),
            grid_spec=pl.GridSpec(grid=grid,
                                  in_specs=[row_spec, col_spec],
                                  out_specs=out_spec),
            compiler_params=cparams,
            cost_estimate=cost,
        )(row2, col2)

    # Non-scalar param_a: fold the minus sign into the O(N) factors and stream
    # param_a un-negated with a BlockSpec matching its true (broadcast) rank.
    row2 = (-row).reshape(n0, 1)
    col2 = (-col).reshape(1, n1)
    if row_like_a:
        a2 = a.reshape(n0, 1)
        a_spec = pl.BlockSpec((tm, 1), lambda i, j: (i, 0))
    elif col_like_a:
        a2 = a.reshape(1, n1)
        a_spec = pl.BlockSpec((1, tn), lambda i, j: (0, j))
    else:
        # Truly full-rank a (broadcast_to is a no-op for an (n0, n1) array).
        a2 = jnp.broadcast_to(a, (n0, n1))
        a_spec = pl.BlockSpec((tm, tn), lambda i, j: (i, j))

    return pl.pallas_call(
        _scale_add_kernel,
        out_shape=jax.ShapeDtypeStruct((n0, n1), out_dtype),
        grid_spec=pl.GridSpec(grid=grid,
                              in_specs=[a_spec, row_spec, col_spec],
                              out_specs=out_spec),
        compiler_params=cparams,
        cost_estimate=cost,
    )(a2, row2, col2)


def _reference(quad_x, param_a, tensor_dim, quad_concat):
    """Pure-JAX transcription of the exact PyTorch forward semantics."""
    dim_shuff = [int(d) for d in tensor_dim]
    num_dim = len(dim_shuff)
    dim_index = np.arange(num_dim)

    idx = quad_concat[0]
    a = (quad_x[idx[0]][:, 0] ** 2 - quad_x[idx[0]][:, 0]).reshape(dim_shuff[0], 1)
    for j in range(len(idx) - 1):
        a = a + (quad_x[idx[j + 1]][:, 0] ** 2
                 - quad_x[idx[j + 1]][:, 0]).reshape(dim_shuff[0], 1)
    a = jnp.tile(a, (1, int(np.prod(dim_shuff[1:]))))      # torch .repeat(1, M)
    sum_tensor = a.reshape(dim_shuff)

    for i in range(len(quad_concat) - 1):
        dim_shuff1 = [int(d) for d in np.roll(dim_shuff, -(i + 1))]
        idx = quad_concat[i + 1]
        a = (quad_x[idx[0]][:, 0] ** 2
             - quad_x[idx[0]][:, 0]).reshape(dim_shuff1[0], 1)
        for j in range(len(idx) - 1):
            a = a + (quad_x[idx[j + 1]][:, 0] ** 2
                     - quad_x[idx[j + 1]][:, 0]).reshape(dim_shuff1[0], 1)
        a = jnp.tile(a, (1, int(np.prod(dim_shuff1[1:]))))
        a = a.reshape(dim_shuff1)
        a = jnp.transpose(a, [int(t) for t in np.roll(dim_index, i + 1)])
        sum_tensor = sum_tensor + a

    return -jnp.asarray(param_a) * sum_tensor


if __name__ == "__main__":
    key = jax.random.PRNGKey(0)
    n0, n1 = 64, 256
    tensor_dim = [n0, n1]
    quad_concat = [[0, 2], [1]]      # 3 quadrature coordinate arrays total

    keys = jax.random.split(key, 8)
    quad_x = [
        jax.random.uniform(keys[0], (n0, 1), dtype=jnp.float32),
        jax.random.uniform(keys[1], (n1, 1), dtype=jnp.float32),
        jax.random.uniform(keys[2], (n0, 1), dtype=jnp.float32),
    ]
    a_scalar = jax.random.uniform(keys[3], (1,), dtype=jnp.float32) + 0.5
    a_row = jax.random.normal(keys[4], (n0, 1), dtype=jnp.float32)
    a_col = jax.random.normal(keys[5], (n1,), dtype=jnp.float32)
    a_full = jax.random.normal(keys[6], (n0, n1), dtype=jnp.float32)

    for name, a in [("scalar", a_scalar), ("row", a_row),
                    ("col", a_col), ("full", a_full)]:
        out = jax.block_until_ready(
            poi2d_with_a_tensor_cat(quad_x, a, tensor_dim, quad_concat))
        ref = _reference(quad_x, a, tensor_dim, quad_concat)
        assert out.shape == (n0, n1)
        assert jnp.allclose(out, ref, atol=1e-5, rtol=1e-5), \
            f"{name} param_a mismatch"

    # Small-shape case (lane width < 128) -> pure-XLA wrapper fallback.
    m = 16
    qx_s = [jax.random.uniform(keys[7], (m, 1), dtype=jnp.float32)
            for _ in range(3)]
    a_s = jnp.float32(0.7)
    out_s = jax.block_until_ready(
        poi2d_with_a_tensor_cat(qx_s, a_s, [m, m], quad_concat))
    ref_s = _reference(qx_s, a_s, [m, m], quad_concat)
    assert jnp.allclose(out_s, ref_s, atol=1e-6, rtol=1e-5), "small-shape mismatch"

    print("KERNEL_OK")
</pallas_src>

<mosaic_0001>
module attributes {stable_mosaic.version = 11 : i64} {
  func.func @_add_kernel(%arg0: i32, %arg1: i32, %arg2: memref<32x1xf32, #tpu.memory_space<vmem>>, %arg3: memref<1x256xf32, #tpu.memory_space<vmem>>, %arg4: memref<32x256xf32, #tpu.memory_space<vmem>>) attributes {dimension_semantics = [#tpu.dimension_semantics<parallel>, #tpu.dimension_semantics<parallel>], iteration_bounds = array<i64: 2, 1>, scalar_prefetch = 0 : i64, scratch_operands = 0 : i64, tpu.core_type = #tpu.core_type<tc>, window_params = [{transform_indices = @transform_0, window_bounds = array<i64: 32, 1>}, {transform_indices = @transform_1, window_bounds = array<i64: 1, 256>}, {transform_indices = @transform_2, window_bounds = array<i64: 32, 256>}]} {
    %c0 = arith.constant 0 : index
    %c0_0 = arith.constant 0 : index
    %0 = vector.load %arg2[%c0, %c0_0] : memref<32x1xf32, #tpu.memory_space<vmem>>, vector<32x1xf32>
    %c0_1 = arith.constant 0 : index
    %c0_2 = arith.constant 0 : index
    %1 = vector.load %arg3[%c0_1, %c0_2] : memref<1x256xf32, #tpu.memory_space<vmem>>, vector<1x256xf32>
    %2 = vector.broadcast %0 : vector<32x1xf32> to vector<32x256xf32>
    %3 = vector.broadcast %1 : vector<1x256xf32> to vector<32x256xf32>
    %4 = arith.addf %2, %3 : vector<32x256xf32>
    %c0_3 = arith.constant 0 : index
    %c0_4 = arith.constant 0 : index
    %5 = vector.load %arg4[%c0_3, %c0_4] : memref<32x256xf32, #tpu.memory_space<vmem>>, vector<32x256xf32>
    tpu.vector_store %arg4[%c0_3, %c0_4], %4 {strides = array<i32>} : memref<32x256xf32, #tpu.memory_space<vmem>>, vector<32x256xf32>,
    return
  }
  func.func @transform_0(%arg0: i32, %arg1: i32) -> (i32, i32) {
    %c0_i32 = arith.constant 0 : i32
    %c0_i32_0 = arith.constant 0 : i32
    return %arg0, %c0_i32 : i32, i32
  }
  func.func @transform_1(%arg0: i32, %arg1: i32) -> (i32, i32) {
    %c0_i32 = arith.constant 0 : i32
    %c0_i32_0 = arith.constant 0 : i32
    return %c0_i32, %arg1 : i32, i32
  }
  func.func @transform_2(%arg0: i32, %arg1: i32) -> (i32, i32) {
    %c0_i32 = arith.constant 0 : i32
    return %arg0, %arg1 : i32, i32
  }
}

</mosaic_0001>

<llo_original>
// kernel: tpu_custom_call.1
$region0: #{tpu_custom_call.1}
  #allocation0 [shape = 'u32[]', space=smem, size = 0x4, offset = 0x4, fixed_abs, tag = 'smem constant byte address 0x4 - core index']
  #allocation1 [shape = 'u32[144,128]{1,0:T(1,128)}', space=vmem, size = 0x12000, scoped, tag = 'internal scratch']
  %s0 = inlined_call_operand.vmem [shape: f32[64,1], index: 0, kind: input, shape index: {}]
  %s1 = inlined_call_operand.vmem [shape: f32[1,256], index: 1, kind: input, shape index: {}]
  %s2 = inlined_call_operand.hbm [shape: f32[64,256], index: 2, kind: output, shape index: {}]
  %s3 = sld [smem:[#allocation0]]
  $region41: #{tpu_custom_call.1} parent=0
    _
  %s5 = ssub.s32 1, %s3
  %s6 = scalar_select 0, %s5, %s3
  $region1: #{tpu_custom_call.1} parent=0
    #allocation2 [shape = 'u8[65536]{0}', space=vmem, size = 0x10000, scoped, tag = 'output window, operand 0']
    #allocation3 [shape = 's32[2]{0}', space=sflag, size = 0x8, scoped, tag = 'scoped memory for tpu_custom_call.1']
    %7 = vsyncpa [#allocation3], 0
    %s8 = scalar_lea.sflag [#allocation3], 1
    %9 = vsyncpa %s8, 0
    loop: start=0, step=1, limit=4
    $region2: #{tpu_custom_call.1} parent=1 // loop_pre_header
      _
    $region3: #{tpu_custom_call.1} parent=1 // loop_header
      %s11 = sphi 0, %s15
      %p12 = scmp.ge.s32.totalorder %s11, 4
      %s18 = sphi 0, %s30
      %s19 = sphi 0, %s26
      %s20 = sphi 0, %s18
      %s21 = sphi 0, %s19
      %s22 = sphi 0, %s20
      %s23 = sphi 0, %s21
      %s33 = sphi 0, %s35
      %s36 = sphi 0, %s33
      %s37 = sphi 0, %s36
      %s53 = sphi 0, %s37
      %s59 = sphi 0, %s61
      %s62 = sphi 0, %s59
      %s63 = sphi 0, %s62
      %s79 = sphi 0, %s63
      %s87 = sphi 0, %s89
      %s90 = sphi 0, %s87
      %s91 = sphi 0, %s90
      %s107 = sphi 0, %s91
    $region4: #{tpu_custom_call.1} parent=1 // loop_header_branch
      %14 = sbr.rel (%p12) target = $region8
    $region5: #{tpu_custom_call.1} parent=1 // loop_body
      %s16 = ssub.s32 %s11, 1
      %s17 = ssub.s32 %s11, 2
      %s24 = sadd.s32 1, %s19
      %p25 = scmp.ge.s32.totalorder %s24, 1
      %s26 = scalar_select %p25, 0, %s24
      %s27 = sadd.s32 1, %s18
      %s28 = scalar_select %p25, %s27, %s18
      %p29 = scmp.ge.s32.totalorder %s28, 2
      %s30 = scalar_select %p29, 0, %s28
      %s31 = ssub.s32 %s18, %s30
      %p32 = scmp.eq.s32.totalorder %s31, 0
      %s34 = sadd.s32 %s33, 1
      %s35 = scalar_select %p32, %s33, %s34
      %p38 = pneg %p32
      %p39 = scmp.eq.s32.totalorder %s11, 1
      %p40 = por %p38, %p39
      %p41 = scmp.ne.s32.totalorder %s33, %s36
      %p42 = scmp.eq.s32.totalorder %s11, 0
      %p43 = por %p41, %p42
      %p44 = scmp.ne.s32.totalorder %s33, %s36
      %p45 = scmp.eq.s32.totalorder %s16, 1
      %p46 = por %p44, %p45
      %p47 = scmp.ne.s32.totalorder %s36, %s37
      %p48 = scmp.eq.s32.totalorder %s16, 0
      %p49 = por %p47, %p48
      %p50 = scmp.ne.s32.totalorder %s36, %s37
      %p51 = scmp.eq.s32.totalorder %s17, 1
      %p52 = por %p50, %p51
      %p54 = scmp.ne.s32.totalorder %s37, %s53
      %p55 = scmp.eq.s32.totalorder %s17, 0
      %p56 = por %p54, %p55
      %s57 = ssub.s32 %s19, %s26
      %p58 = scmp.eq.s32.totalorder %s57, 0
      %s60 = sadd.s32 %s59, 1
      %s61 = scalar_select %p58, %s59, %s60
      %p64 = pneg %p58
      %p65 = scmp.eq.s32.totalorder %s11, 1
      %p66 = por %p64, %p65
      %p67 = scmp.ne.s32.totalorder %s59, %s62
      %p68 = scmp.eq.s32.totalorder %s11, 0
      %p69 = por %p67, %p68
      %p70 = scmp.ne.s32.totalorder %s59, %s62
      %p71 = scmp.eq.s32.totalorder %s16, 1
      %p72 = por %p70, %p71
      %p73 = scmp.ne.s32.totalorder %s62, %s63
      %p74 = scmp.eq.s32.totalorder %s16, 0
      %p75 = por %p73, %p74
      %p76 = scmp.ne.s32.totalorder %s62, %s63
      %p77 = scmp.eq.s32.totalorder %s17, 1
      %p78 = por %p76, %p77
      %p80 = scmp.ne.s32.totalorder %s63, %s79
      %p81 = scmp.eq.s32.totalorder %s17, 0
      %p82 = por %p80, %p81
      %s83 = ssub.s32 %s18, %s30
      %s84 = ssub.s32 %s19, %s26
      %s85 = sor.u32 %s83, %s84
      %p86 = scmp.eq.s32.totalorder %s85, 0
      %s88 = sadd.s32 %s87, 1
      %s89 = scalar_select %p86, %s87, %s88
      %p92 = pneg %p86
      %p93 = scmp.eq.s32.totalorder %s11, 1
      %p94 = por %p92, %p93
      %p95 = scmp.ne.s32.totalorder %s87, %s90
      %p96 = scmp.eq.s32.totalorder %s11, 0
      %p97 = por %p95, %p96
      %p98 = scmp.ne.s32.totalorder %s87, %s90
      %p99 = scmp.eq.s32.totalorder %s16, 1
      %p100 = por %p98, %p99
      %p101 = scmp.ne.s32.totalorder %s90, %s91
      %p102 = scmp.eq.s32.totalorder %s16, 0
      %p103 = por %p101, %p102
      %p104 = scmp.ne.s32.totalorder %s90, %s91
      %p105 = scmp.eq.s32.totalorder %s17, 1
      %p106 = por %p104, %p105
      %p108 = scmp.ne.s32.totalorder %s91, %s107
      %p109 = scmp.eq.s32.totalorder %s17, 0
      %p110 = por %p108, %p109
      %p111 = scmp.le.s32.totalorder 1, %s11
      %p112 = scmp.lt.s32.totalorder %s11, 3
      %p113 = pnand %p111, %p112
      %p114 = pneg %p113
      // Predicated region
      $region9: #{tpu_custom_call.1} parent=5 // pred_check
        _
      $region10: #{tpu_custom_call.1} parent=5 // pred_check_branch
        %116 = sbr.rel (%p113) target = $region12
      $region11: #{tpu_custom_call.1} parent=5 // pred_region
        %s117 = ssub.s32 %s11, 1
        // Predicated region
        $region13: #{tpu_custom_call.1} parent=11 // pred_check
          %p118 = pneg %p75
        $region14: #{tpu_custom_call.1} parent=11 // pred_check_branch
          %120 = sbr.rel (%p118) target = $region16
        $region15: #{tpu_custom_call.1} parent=11 // pred_region
          %s121 = smul.u32 2, %s21
          %p122 = scmp.lt.s32.totalorder %s121, 1
          %s123 = scalar_select %p122, %s121, 1
          %s124 = scalar_lea.vmem %s1, %s123
          %s125 = smul.u32 2, %s21
        $region16: #{tpu_custom_call.1} parent=11 // pred_fallthru
          _
      $region12: #{tpu_custom_call.1} parent=5 // pred_fallthru
        _
      %p126 = scmp.lt.s32.totalorder %s11, 2
      // Predicated region
      $region17: #{tpu_custom_call.1} parent=5 // pred_check
        %p127 = pneg %p126
      $region18: #{tpu_custom_call.1} parent=5 // pred_check_branch
        %129 = sbr.rel (%p127) target = $region20
      $region19: #{tpu_custom_call.1} parent=5 // pred_region
        // Predicated region
        $region21: #{tpu_custom_call.1} parent=19 // pred_check
          %p130 = pneg %p43
        $region22: #{tpu_custom_call.1} parent=19 // pred_check_branch
          %132 = sbr.rel (%p130) target = $region24
        $region23: #{tpu_custom_call.1} parent=19 // pred_region
          %s133 = smul.u32 4, %s18
          %p134 = scmp.lt.s32.totalorder %s133, 7
          %s135 = scalar_select %p134, %s133, 7
          %s136 = smul.addr %s135, 8
          %s137 = scalar_lea.vmem %s0, %s136
          %s138 = smul.u32 4, %s18
        $region24: #{tpu_custom_call.1} parent=19 // pred_fallthru
          _
      $region20: #{tpu_custom_call.1} parent=5 // pred_fallthru
        _
      %p139 = scmp.le.s32.totalorder 1, %s11
      %p140 = scmp.lt.s32.totalorder %s11, 3
      %p141 = pnand %p139, %p140
      %p142 = pneg %p141
      // Predicated region
      $region25: #{tpu_custom_call.1} parent=5 // pred_check
        _
      $region26: #{tpu_custom_call.1} parent=5 // pred_check_branch
        %144 = sbr.rel (%p141) target = $region28
      $region27: #{tpu_custom_call.1} parent=5 // pred_region
        %s145 = ssub.s32 %s11, 1
        %s146 = smul.u32 4, %s20
        %p147 = scmp.lt.s32.totalorder %s146, 7
        %s148 = scalar_select %p147, %s146, 7
        %s149 = smul.addr %s148, 8
        %s150 = scalar_lea.vmem %s0, %s149
        %p151 = pneg %p49
        %p152 = pneg %p46
        %s153 = smul.u32 2, %s21
        %p154 = scmp.lt.s32.totalorder %s153, 1
        %s155 = scalar_select %p154, %s153, 1
        %s156 = scalar_lea.vmem %s1, %s155
        %p157 = pneg %p75
        %p158 = pneg %p72
        %p159 = pneg %p103
        %p160 = pneg %p100
        %s161 = sand.u32 %s90, 1
        %s162 = scalar_lea.sflag [#allocation3], %s161
        %s163 = sand.u32 %s90, 1
        %s164 = smul.addr %s163, 64
        %s165 = scalar_lea.vmem [#allocation2], %s164
        %s166 = smul.u32 4, %s20
        %p167 = scmp.lt.s32.totalorder %s166, 7
        %s168 = scalar_select %p167, %s166, 7
        %s169 = smul.addr %s168, 8
        %s170 = scalar_lea.vmem %s0, %s169
        %s171 = smul.u32 4, %s20
        %s172 = smul.u32 2, %s21
        %p173 = scmp.lt.s32.totalorder %s172, 1
        %s174 = scalar_select %p173, %s172, 1
        %s175 = scalar_lea.vmem %s1, %s174
        %s176 = smul.u32 2, %s21
        %s177 = smul.u32 4, %s20
        %s178 = smul.u32 2, %s21
        %v179 = vld [vmem:[%s170] sm:$0xff]
        %v180 = vld [vmem:[%s170 + $0x8] sm:$0xff]
        %v181 = vld [vmem:[%s170 + $0x10] sm:$0xff]
        %v182 = vld [vmem:[%s170 + $0x18] sm:$0xff]
        %v183 = vld [vmem:[%s175] sm:$0x3]
        %185 = vset.pattern.permute.xlu0 0
        %186 = vperm.xlu0 %185, %v179
        %v187 = vpop.permute.xlu0 %186
        %190 = vset.pattern.permute.xlu0 0
        %191 = vperm.xlu0 %190, %v180
        %v192 = vpop.permute.xlu0 %191
        %195 = vset.pattern.permute.xlu0 0
        %196 = vperm.xlu0 %195, %v181
        %v197 = vpop.permute.xlu0 %196
        %200 = vset.pattern.permute.xlu0 0
        %201 = vperm.xlu0 %200, %v182
        %v202 = vpop.permute.xlu0 %201
        %v205 = vlaneseq
        %v206 = vshrl.u32 %v205, 7
        %v207 = vsub.s32 0, %v206
        %v208 = vrot.slane %v183, %v207
        %v209 = vlaneseq
        %v210 = vshrl.u32 %v209, 7
        %v211 = vsub.s32 1, %v210
        %v212 = vrot.slane %v183, %v211
        %v215 = vadd.f32 %v187, %v208
        %v216 = vadd.f32 %v187, %v212
        %v217 = vadd.f32 %v192, %v208
        %v218 = vadd.f32 %v192, %v212
        %v219 = vadd.f32 %v197, %v208
        %v220 = vadd.f32 %v197, %v212
        %v221 = vadd.f32 %v202, %v208
        %v222 = vadd.f32 %v202, %v212
        %223 = vst [vmem:[%s165] sm:$0xff] %v215
        %224 = vst [vmem:[%s165 + $0x8] sm:$0xff] %v216
        %225 = vst [vmem:[%s165 + $0x10] sm:$0xff] %v217
        %226 = vst [vmem:[%s165 + $0x18] sm:$0xff] %v218
        %227 = vst [vmem:[%s165 + $0x20] sm:$0xff] %v219
        %228 = vst [vmem:[%s165 + $0x28] sm:$0xff] %v220
        %229 = vst [vmem:[%s165 + $0x30] sm:$0xff] %v221
        %230 = vst [vmem:[%s165 + $0x38] sm:$0xff] %v222
        %s231 = sand.u32 %s90, 1
        %s232 = scalar_lea.sflag [#allocation3], %s231
        %s233 = sand.u32 %s90, 1
        %s234 = smul.addr %s233, 64
        %s235 = scalar_lea.vmem [#allocation2], %s234
        // Predicated region
        $region29: #{tpu_custom_call.1} parent=27 // pred_check
          %p236 = pneg %p100
        $region30: #{tpu_custom_call.1} parent=27 // pred_check_branch
          %238 = sbr.rel (%p236) target = $region32
        $region31: #{tpu_custom_call.1} parent=27 // pred_region
          %s239 = smul.u32 4, %s20
          %s240 = smul.u32 2, %s21
          %s242 = ssub.s32 1024, 1024
          %243 = vsyncadd %s232, %s242
          %s244 = smul.addr %s239, 2
          %s245 = sadd.s32 %s240, %s244
          %s246 = smul.addr %s245, 128
          %s247 = scalar_lea.hbm %s2, %s246
          %s248 = sshll.u32 %s235, 4
          %s249 = int_to_ptr.vmem [resolvable:$true] %s248
          %254 = dma.vmem_to_hbm [thread:$0]  %s249, 1024, %s247, %s232, 256, 256, 16
        $region32: #{tpu_custom_call.1} parent=27 // pred_fallthru
          _
      $region28: #{tpu_custom_call.1} parent=5 // pred_fallthru
        _
      %p255 = scmp.le.s32.totalorder 2, %s11
      // Predicated region
      $region33: #{tpu_custom_call.1} parent=5 // pred_check
        %p256 = pneg %p255
      $region34: #{tpu_custom_call.1} parent=5 // pred_check_branch
        %258 = sbr.rel (%p256) target = $region36
      $region35: #{tpu_custom_call.1} parent=5 // pred_region
        %s259 = ssub.s32 %s11, 2
        // Predicated region
        $region37: #{tpu_custom_call.1} parent=35 // pred_check
          %p260 = pneg %p106
        $region38: #{tpu_custom_call.1} parent=35 // pred_check_branch
          %262 = sbr.rel (%p260) target = $region40
        $region39: #{tpu_custom_call.1} parent=35 // pred_region
          %s263 = sand.u32 %s91, 1
          %s264 = scalar_lea.sflag [#allocation3], %s263
          %s265 = sand.u32 %s91, 1
          %s266 = smul.addr %s265, 64
          %s267 = scalar_lea.vmem [#allocation2], %s266
          %268 = dma.done %s264, 1024
        $region40: #{tpu_custom_call.1} parent=35 // pred_fallthru
          _
      $region36: #{tpu_custom_call.1} parent=5 // pred_fallthru
        _
    $region6: #{tpu_custom_call.1} parent=1 // loop_footer
      %s15 = sadd.s32 1, %s11
    $region7: #{tpu_custom_call.1} parent=1 // loop_footer_branch
      %10 = sbr.rel target = $region3
    $region8: #{tpu_custom_call.1} parent=1 // loop_exit
      _
    %269 = vsyncpa [#allocation3], 1
    %s270 = scalar_lea.sflag [#allocation3], 1
    %271 = vsyncpa %s270, 1

</llo_original>
